<compile_context>
chip_gen: v5e
topology: v5e:2x2
jax: 0.10.0
libtpu: 0.0.40
codegen_flags: <defaults>
</compile_context>

<pallas_src>
import functools

import jax
import jax.numpy as jnp
import numpy as np
from jax.experimental import pallas as pl
from jax.experimental.pallas import tpu as pltpu

ROW_BLOCK = 8              # rows per "dataset" block (sublane-aligned)
CHUNK_LEVELS = (32, 8, 1)  # coalescing chunk sizes in blocks (descending, last == 1)
DMA_DEPTH = 8              # rolling window: copies kept in flight per core


def _gather_kernel(src_rows_ref, dst_rows_ref, src_ref, dst_ref, sem, *,
                   level_rows, level_offsets, level_counts, n_shards):
    """Chunk-coalesced row gather via direct HBM->HBM DMA with a rolling window.

    src_rows_ref / dst_rows_ref : SMEM int32[total_copies]  (row start per copy,
        grouped by chunk level; level boundaries are static closure args)
    src_ref : HBM [N_in , D]   (memory_space=pl.ANY — no VMEM staging)
    dst_ref : HBM [N_out, D]   (memory_space=pl.ANY — written only by DMA)
    sem     : DMA semaphore array, DMA_DEPTH slots (one per in-flight copy)
    """
    shard = pl.program_id(0)

    for rows, off, cnt in zip(level_rows, level_offsets, level_counts):
        if cnt == 0:
            continue  # statically skip empty levels (no code, no big wait slices)

        per_shard = -(-cnt // n_shards)  # static cdiv
        lo = off + jnp.minimum(shard * per_shard, cnt)
        hi = off + jnp.minimum(shard * per_shard + per_shard, cnt)

        def _start(i, rows=rows):
            s = pl.multiple_of(src_rows_ref[i], ROW_BLOCK)
            t = pl.multiple_of(dst_rows_ref[i], ROW_BLOCK)
            pltpu.make_async_copy(
                src_ref.at[pl.ds(s, rows), :],
                dst_ref.at[pl.ds(t, rows), :],
                sem.at[i % DMA_DEPTH],
            ).start()

        def _wait(i, rows=rows):
            # Only the shape (byte count) matters for the wait -> fixed offset-0
            # slices: no SMEM reads or scalar multiplies between waits.
            pltpu.make_async_copy(
                src_ref.at[pl.ds(0, rows), :],
                dst_ref.at[pl.ds(0, rows), :],
                sem.at[i % DMA_DEPTH],
            ).wait()

        # Prime the window with up to DMA_DEPTH copies.
        @pl.loop(lo, jnp.minimum(lo + DMA_DEPTH, hi))
        def _(i):
            _start(i)

        # Rolling window: wait copy i, immediately refill its slot with i+DEPTH.
        @pl.loop(lo, hi)
        def _(i):
            _wait(i)

            @pl.when(i + DMA_DEPTH < hi)
            def _():
                _start(i + DMA_DEPTH)


def _plan_copies(block_indices):
    """Host-side run-length coalescing of a composed block-index list.

    Returns flat per-copy (src_row, dst_row) tables grouped by chunk level,
    plus static per-level (rows_per_copy, offset, count).
    """
    idx = np.asarray(block_indices, dtype=np.int64).reshape(-1)
    n = idx.size
    run_starts = np.flatnonzero(np.concatenate(([True], idx[1:] != idx[:-1] + 1)))
    run_ends = np.concatenate((run_starts[1:], [n]))

    per_level_src = {c: [] for c in CHUNK_LEVELS}
    per_level_dst = {c: [] for c in CHUNK_LEVELS}
    for rs, re in zip(run_starts.tolist(), run_ends.tolist()):
        length = re - rs
        s_blk, d_blk, done = int(idx[rs]), rs, 0
        for c in CHUNK_LEVELS:  # greedy decomposition, largest chunks first
            while length - done >= c:
                per_level_src[c].append((s_blk + done) * ROW_BLOCK)
                per_level_dst[c].append((d_blk + done) * ROW_BLOCK)
                done += c

    level_rows, level_offsets, level_counts = [], [], []
    src_rows, dst_rows = [], []
    for c in CHUNK_LEVELS:
        level_rows.append(c * ROW_BLOCK)
        level_offsets.append(len(src_rows))
        level_counts.append(len(per_level_src[c]))
        src_rows.extend(per_level_src[c])
        dst_rows.extend(per_level_dst[c])

    return (np.asarray(src_rows, np.int32), np.asarray(dst_rows, np.int32),
            tuple(level_rows), tuple(level_offsets), tuple(level_counts))


def _gather_row_blocks(datasets, block_indices):
    """Single fused row-block gather: out[b] = datasets[block_indices[b]]."""
    block_indices = np.asarray(block_indices, dtype=np.int64).reshape(-1)
    if datasets.ndim != 2:
        raise ValueError("datasets must be laid out as [num_samples, num_features]")
    n, d = datasets.shape
    if n % ROW_BLOCK != 0:
        raise ValueError(f"sample count must be a multiple of {ROW_BLOCK}; pad first")
    n_in_blocks = n // ROW_BLOCK
    n_valid = int(block_indices.size)
    if n_valid == 0:
        return datasets[:0]
    # Host-side bounds check: DMA out-of-bounds is not reliably caught at runtime.
    if block_indices.min() < 0 or block_indices.max() >= n_in_blocks:
        raise ValueError("block index out of range for the given dataset stack")

    src_rows, dst_rows, level_rows, level_offsets, level_counts = _plan_copies(
        block_indices)
    total_copies = int(src_rows.size)
    # v7x: 2 TensorCores => 2 independent DMA-issue streams; no-op on v5e/v6e.
    n_shards = 2 if total_copies >= 2 else 1

    kernel = functools.partial(
        _gather_kernel,
        level_rows=level_rows, level_offsets=level_offsets,
        level_counts=level_counts, n_shards=n_shards)

    grid_spec = pltpu.PrefetchScalarGridSpec(
        num_scalar_prefetch=2,                          # copy tables -> SMEM
        grid=(n_shards,),
        in_specs=[pl.BlockSpec(memory_space=pl.ANY)],   # raw HBM source
        out_specs=pl.BlockSpec(memory_space=pl.ANY),    # raw HBM destination
        scratch_shapes=[pltpu.SemaphoreType.DMA((DMA_DEPTH,))],
    )
    return pl.pallas_call(
        kernel,
        out_shape=jax.ShapeDtypeStruct((n_valid * ROW_BLOCK, d), datasets.dtype),
        grid_spec=grid_spec,
        compiler_params=pltpu.CompilerParams(
            # Each shard writes a disjoint output row range -> genuinely parallel.
            dimension_semantics=("parallel",),
        ),
    )(jnp.asarray(src_rows), jnp.asarray(dst_rows), datasets)


class SubsetDatasetsBase:
    """Splitter: keeps the row-blocks listed in `block_indices` (in order)."""

    def __init__(self, block_indices):
        arr = np.asarray(block_indices, dtype=np.int64).reshape(-1)
        if arr.size and arr.min() < 0:
            raise ValueError("block indices must be non-negative")
        self.block_indices = arr

    def __call__(self, datasets):
        return _gather_row_blocks(datasets, self.block_indices)


class DatasetSubsetPipeline:
    """Analogue of the PyTorch module: sequentially apply splitters.

    The splitter chain is fused into a single gather by composing the block
    index lists on the host (a few-hundred-element int op) and launching one
    Pallas kernel, instead of one HBM round trip per splitter.
    """

    def __init__(self, *dataset_splitters):
        for dataset_splitter in dataset_splitters:
            if not isinstance(dataset_splitter, SubsetDatasetsBase):
                raise ValueError(
                    "Dataset splitter must be a child class of SubsetDatasetsBase"
                )
        self.dataset_splitters = dataset_splitters

    def __call__(self, datasets):
        if not self.dataset_splitters:
            return datasets
        composed = self.dataset_splitters[0].block_indices
        for splitter in self.dataset_splitters[1:]:
            # subsets = splitter(subsets)  <=>  composed = composed[splitter.idx]
            composed = composed[splitter.block_indices]
        return _gather_row_blocks(datasets, composed)


if __name__ == "__main__":
    key = jax.random.PRNGKey(0)

    # Small "stack of datasets": 512 samples (64 row-blocks) x 128 features
    # (lane-dense last dim), f32.
    N, D = 512, 128
    datasets = jax.random.normal(key, (N, D), dtype=jnp.float32)

    def take_blocks(x, blocks):
        rows = (np.asarray(blocks)[:, None] * ROW_BLOCK
                + np.arange(ROW_BLOCK)[None, :]).reshape(-1)
        return np.asarray(x)[rows]

    # 1) Pipeline of three splitters (fused on the host into ONE gather).
    idx1 = np.arange(0, 48)                                                 # 48 blocks
    idx2 = np.array([0, 1, 2, 3, 4, 5, 6, 7, 8, 9, 10, 11,
                     40, 41, 20, 5, 33, 34, 35, 2])                         # 20 blocks
    idx3 = np.array([0, 1, 2, 3, 10, 7, 15, 16, 17, 5])                     # 10 blocks
    pipeline = DatasetSubsetPipeline(
        SubsetDatasetsBase(idx1), SubsetDatasetsBase(idx2), SubsetDatasetsBase(idx3)
    )
    out = jax.block_until_ready(pipeline(datasets))
    ref = take_blocks(take_blocks(take_blocks(datasets, idx1), idx2), idx3)
    assert out.shape == ref.shape, (out.shape, ref.shape)
    assert np.array_equal(np.asarray(out), ref), "pipeline mismatch vs reference"

    # 2) Single splitter with a long contiguous run (exercises 32- and 8-block
    #    coalesced DMAs), scattered singles, and an odd copy count per shard.
    idx_mix = np.concatenate([np.arange(40), np.array([3, 1, 2]), np.arange(10, 29)])
    out2 = jax.block_until_ready(SubsetDatasetsBase(idx_mix)(datasets))
    ref2 = take_blocks(datasets, idx_mix)
    assert np.array_equal(np.asarray(out2), ref2), "coalesced gather mismatch vs reference"

    # 3) Tiny subset: single copy, single shard.
    out3 = jax.block_until_ready(SubsetDatasetsBase(np.array([7]))(datasets))
    ref3 = take_blocks(datasets, np.array([7]))
    assert np.array_equal(np.asarray(out3), ref3), "single-block gather mismatch vs reference"

    # TODO(synk): the original module operates on Python dataset objects
    # (torch.utils.data.Dataset); only the row-subset gather hot path is
    # expressible as a TPU kernel.
    print("KERNEL_OK")
</pallas_src>

<mosaic_0001>
module attributes {stable_mosaic.version = 11 : i64} {
  func.func @_gather_kernel(%arg0: i32, %arg1: memref<10xi32, #tpu.memory_space<smem>>, %arg2: memref<10xi32, #tpu.memory_space<smem>>, %arg3: memref<512x128xf32, #tpu.memory_space<any>>, %arg4: memref<80x128xf32, #tpu.memory_space<any>>, %arg5: memref<8x!tpu.dma_semaphore, #tpu.memory_space<semaphore_mem>>) attributes {dimension_semantics = [#tpu.dimension_semantics<parallel>], iteration_bounds = array<i64: 2>, scalar_prefetch = 2 : i64, scratch_operands = 1 : i64, tpu.core_type = #tpu.core_type<tc>, window_params = [{}, {}]} {
    %c5_i32 = arith.constant 5 : i32
    %0 = arith.muli %arg0, %c5_i32 : i32
    %c10_i32 = arith.constant 10 : i32
    %1 = arith.minsi %0, %c10_i32 : i32
    %c0_i32 = arith.constant 0 : i32
    %2 = arith.addi %c0_i32, %1 : i32
    %c5_i32_0 = arith.constant 5 : i32
    %3 = arith.muli %arg0, %c5_i32_0 : i32
    %c5_i32_1 = arith.constant 5 : i32
    %4 = arith.addi %3, %c5_i32_1 : i32
    %c10_i32_2 = arith.constant 10 : i32
    %5 = arith.minsi %4, %c10_i32_2 : i32
    %c0_i32_3 = arith.constant 0 : i32
    %6 = arith.addi %c0_i32_3, %5 : i32
    %c8_i32 = arith.constant 8 : i32
    %7 = arith.addi %2, %c8_i32 : i32
    %8 = arith.minsi %7, %6 : i32
    %9 = arith.subi %8, %2 : i32
    %c1_i32 = arith.constant 1 : i32
    %c1_i32_4 = arith.constant 1 : i32
    %10 = arith.subi %c1_i32, %c1_i32_4 : i32
    %11 = arith.addi %9, %10 : i32
    %c1_i32_5 = arith.constant 1 : i32
    %12 = arith.divsi %11, %c1_i32_5 : i32
    %c1_i32_6 = arith.constant 1 : i32
    %c0_i32_7 = arith.constant 0 : i32
    %13 = arith.subi %12, %c0_i32_7 : i32
    %14 = arith.addi %c0_i32_7, %13 : i32
    %c1_i32_8 = arith.constant 1 : i32
    scf.for %arg6 = %c0_i32_7 to %14 step %c1_i32_8  : i32 {
      %21 = arith.muli %arg6, %c1_i32_6 : i32
      %22 = arith.addi %2, %21 : i32
      %23 = arith.index_cast %22 : i32 to index
      %24 = memref.load %arg1[%23] : memref<10xi32, #tpu.memory_space<smem>>
      %25 = tpu.assume_multiple %24, 8 : i32
      %26 = arith.index_cast %22 : i32 to index
      %27 = memref.load %arg2[%26] : memref<10xi32, #tpu.memory_space<smem>>
      %28 = tpu.assume_multiple %27, 8 : i32
      %c8_i32_15 = arith.constant 8 : i32
      %c0_i32_16 = arith.constant 0 : i32
      %29 = arith.cmpi eq, %c8_i32_15, %c0_i32_16 : i32
      %c1_i32_17 = arith.constant 1 : i32
      %30 = arith.select %29, %c1_i32_17, %c8_i32_15 : i32
      %31 = arith.remsi %22, %30 : i32
      %c0_i32_18 = arith.constant 0 : i32
      %32 = arith.cmpi ne, %31, %c0_i32_18 : i32
      %c0_i32_19 = arith.constant 0 : i32
      %33 = arith.cmpi slt, %31, %c0_i32_19 : i32
      %c0_i32_20 = arith.constant 0 : i32
      %34 = arith.cmpi slt, %30, %c0_i32_20 : i32
      %35 = arith.xori %33, %34 : i1
      %36 = arith.andi %35, %32 : i1
      %37 = arith.addi %31, %30 : i32
      %38 = arith.select %36, %37, %31 : i32
      %c0_i32_21 = arith.constant 0 : i32
      %39 = tpu.memref_slice %arg3[%25, %c0_i32_21] : memref<512x128xf32, #tpu.memory_space<any>> -> memref<8x128xf32, #tpu.memory_space<any>>
      %c0_i32_22 = arith.constant 0 : i32
      %40 = tpu.memref_slice %arg4[%28, %c0_i32_22] : memref<80x128xf32, #tpu.memory_space<any>> -> memref<8x128xf32, #tpu.memory_space<any>>
      %41 = tpu.memref_slice %arg5[%38] : memref<8x!tpu.dma_semaphore, #tpu.memory_space<semaphore_mem>> -> memref<1x!tpu.dma_semaphore, #tpu.memory_space<semaphore_mem>>
      %42 = tpu.memref_squeeze %41 : memref<1x!tpu.dma_semaphore, #tpu.memory_space<semaphore_mem>> -> memref<!tpu.dma_semaphore, #tpu.memory_space<semaphore_mem>>
      tpu.enqueue_dma source(%39 : memref<8x128xf32, #tpu.memory_space<any>>) target(%40 : memref<8x128xf32, #tpu.memory_space<any>>) target_semaphore(%42 : memref<!tpu.dma_semaphore, #tpu.memory_space<semaphore_mem>>)
    }
    %15 = arith.subi %6, %2 : i32
    %c1_i32_9 = arith.constant 1 : i32
    %c1_i32_10 = arith.constant 1 : i32
    %16 = arith.subi %c1_i32_9, %c1_i32_10 : i32
    %17 = arith.addi %15, %16 : i32
    %c1_i32_11 = arith.constant 1 : i32
    %18 = arith.divsi %17, %c1_i32_11 : i32
    %c1_i32_12 = arith.constant 1 : i32
    %c0_i32_13 = arith.constant 0 : i32
    %19 = arith.subi %18, %c0_i32_13 : i32
    %20 = arith.addi %c0_i32_13, %19 : i32
    %c1_i32_14 = arith.constant 1 : i32
    scf.for %arg6 = %c0_i32_13 to %20 step %c1_i32_14  : i32 {
      %21 = arith.muli %arg6, %c1_i32_12 : i32
      %22 = arith.addi %2, %21 : i32
      %c8_i32_15 = arith.constant 8 : i32
      %c0_i32_16 = arith.constant 0 : i32
      %23 = arith.cmpi eq, %c8_i32_15, %c0_i32_16 : i32
      %c1_i32_17 = arith.constant 1 : i32
      %24 = arith.select %23, %c1_i32_17, %c8_i32_15 : i32
      %25 = arith.remsi %22, %24 : i32
      %c0_i32_18 = arith.constant 0 : i32
      %26 = arith.cmpi ne, %25, %c0_i32_18 : i32
      %c0_i32_19 = arith.constant 0 : i32
      %27 = arith.cmpi slt, %25, %c0_i32_19 : i32
      %c0_i32_20 = arith.constant 0 : i32
      %28 = arith.cmpi slt, %24, %c0_i32_20 : i32
      %29 = arith.xori %27, %28 : i1
      %30 = arith.andi %29, %26 : i1
      %31 = arith.addi %25, %24 : i32
      %32 = arith.select %30, %31, %25 : i32
      %c0_i32_21 = arith.constant 0 : i32
      %c0_i32_22 = arith.constant 0 : i32
      %33 = tpu.memref_slice %arg3[%c0_i32_21, %c0_i32_22] : memref<512x128xf32, #tpu.memory_space<any>> -> memref<8x128xf32, #tpu.memory_space<any>>
      %c0_i32_23 = arith.constant 0 : i32
      %c0_i32_24 = arith.constant 0 : i32
      %34 = tpu.memref_slice %arg4[%c0_i32_23, %c0_i32_24] : memref<80x128xf32, #tpu.memory_space<any>> -> memref<8x128xf32, #tpu.memory_space<any>>
      %35 = tpu.memref_slice %arg5[%32] : memref<8x!tpu.dma_semaphore, #tpu.memory_space<semaphore_mem>> -> memref<1x!tpu.dma_semaphore, #tpu.memory_space<semaphore_mem>>
      %36 = tpu.memref_squeeze %35 : memref<1x!tpu.dma_semaphore, #tpu.memory_space<semaphore_mem>> -> memref<!tpu.dma_semaphore, #tpu.memory_space<semaphore_mem>>
      tpu.wait_dma2 semaphore(%36 : memref<!tpu.dma_semaphore, #tpu.memory_space<semaphore_mem>>) src(%33 : memref<8x128xf32, #tpu.memory_space<any>>) dst(%34 : memref<8x128xf32, #tpu.memory_space<any>>)
      %c8_i32_25 = arith.constant 8 : i32
      %37 = arith.addi %22, %c8_i32_25 : i32
      %38 = arith.cmpi slt, %37, %6 : i32
      %39 = arith.extui %38 : i1 to i32
      %c0_i32_26 = arith.constant 0 : i32
      %40 = arith.cmpi ne, %39, %c0_i32_26 : i32
      scf.if %40 {
        %c8_i32_27 = arith.constant 8 : i32
        %41 = arith.addi %22, %c8_i32_27 : i32
        %42 = arith.index_cast %41 : i32 to index
        %43 = memref.load %arg1[%42] : memref<10xi32, #tpu.memory_space<smem>>
        %44 = tpu.assume_multiple %43, 8 : i32
        %45 = arith.index_cast %41 : i32 to index
        %46 = memref.load %arg2[%45] : memref<10xi32, #tpu.memory_space<smem>>
        %47 = tpu.assume_multiple %46, 8 : i32
        %c8_i32_28 = arith.constant 8 : i32
        %c0_i32_29 = arith.constant 0 : i32
        %48 = arith.cmpi eq, %c8_i32_28, %c0_i32_29 : i32
        %c1_i32_30 = arith.constant 1 : i32
        %49 = arith.select %48, %c1_i32_30, %c8_i32_28 : i32
        %50 = arith.remsi %41, %49 : i32
        %c0_i32_31 = arith.constant 0 : i32
        %51 = arith.cmpi ne, %50, %c0_i32_31 : i32
        %c0_i32_32 = arith.constant 0 : i32
        %52 = arith.cmpi slt, %50, %c0_i32_32 : i32
        %c0_i32_33 = arith.constant 0 : i32
        %53 = arith.cmpi slt, %49, %c0_i32_33 : i32
        %54 = arith.xori %52, %53 : i1
        %55 = arith.andi %54, %51 : i1
        %56 = arith.addi %50, %49 : i32
        %57 = arith.select %55, %56, %50 : i32
        %c0_i32_34 = arith.constant 0 : i32
        %58 = tpu.memref_slice %arg3[%44, %c0_i32_34] : memref<512x128xf32, #tpu.memory_space<any>> -> memref<8x128xf32, #tpu.memory_space<any>>
        %c0_i32_35 = arith.constant 0 : i32
        %59 = tpu.memref_slice %arg4[%47, %c0_i32_35] : memref<80x128xf32, #tpu.memory_space<any>> -> memref<8x128xf32, #tpu.memory_space<any>>
        %60 = tpu.memref_slice %arg5[%57] : memref<8x!tpu.dma_semaphore, #tpu.memory_space<semaphore_mem>> -> memref<1x!tpu.dma_semaphore, #tpu.memory_space<semaphore_mem>>
        %61 = tpu.memref_squeeze %60 : memref<1x!tpu.dma_semaphore, #tpu.memory_space<semaphore_mem>> -> memref<!tpu.dma_semaphore, #tpu.memory_space<semaphore_mem>>
        tpu.enqueue_dma source(%58 : memref<8x128xf32, #tpu.memory_space<any>>) target(%59 : memref<8x128xf32, #tpu.memory_space<any>>) target_semaphore(%61 : memref<!tpu.dma_semaphore, #tpu.memory_space<semaphore_mem>>)
      } else {
      }
    }
    return
  }
}

</mosaic_0001>

<llo_original>
// kernel: tpu_custom_call.1
$region0: #{tpu_custom_call.1}
  #allocation0 [shape = 'u32[]', space=smem, size = 0x4, offset = 0x4, fixed_abs, tag = 'smem constant byte address 0x4 - core index']
  #allocation1 [shape = 'u32[72,128]{1,0:T(1,128)}', space=vmem, size = 0x9000, scoped, tag = 'internal scratch']
  #allocation2 [shape = 's32[8]{0}', space=sflag, size = 0x20, scoped, tag = 'scratch operand']
  #allocation3 [shape = 's32[1]{0}', space=sflag, size = 0x4, scoped, tag = 'scoped memory for tpu_custom_call.1']
  #allocation4 [shape = 'u8[512]{0}', space=smem, size = 0x200, scoped, tag = 'prefetched SMEM operand 0']
  #allocation5 [shape = 'u8[512]{0}', space=smem, size = 0x200, scoped, tag = 'prefetched SMEM operand 1']
  #allocation6 [shape = 's32[]', space=sflag, size = 0x4, offset = 0, fixed_abs, tag = 'sflag constant byte address 0x0 - dummy sync flag']
  #allocation7 [shape = 'u32[0]{0}', space=smem, size = 0, offset = 0, fixed_abs, tag = 'smem constant byte address 0x0 - null']
  #allocation8 [shape = 's32[]', space=sflag, size = 0x4, offset = 0, fixed_abs, tag = 'sflag constant byte address 0x0 - dummy sync flag']
  #allocation9 [shape = 'u32[0]{0}', space=smem, size = 0, offset = 0, fixed_abs, tag = 'smem constant byte address 0x0 - null']
  %s0 = inlined_call_operand.hbm [shape: s32[10], index: 0, kind: input, shape index: {}]
  %s1 = inlined_call_operand.hbm [shape: s32[10], index: 1, kind: input, shape index: {}]
  %s2 = inlined_call_operand.hbm [shape: f32[512,128], index: 2, kind: input, shape index: {}]
  %s3 = inlined_call_operand.hbm [shape: f32[80,128], index: 3, kind: output, shape index: {}]
  %s4 = sld [smem:[#allocation0]]
  $region27: #{tpu_custom_call.1} parent=0
    _
  %s6 = ssub.s32 1, %s4
  %s7 = scalar_select 0, %s6, %s4
  %s9 = sshll.u32 %s0, 4
  %s10 = int_to_ptr.hbm [resolvable:$true] %s9
  %12 = dma.hbm_to_smem %s10, 16, [#allocation4], [#allocation3]
  %s14 = sshll.u32 %s1, 4
  %s15 = int_to_ptr.hbm [resolvable:$true] %s14
  %17 = dma.hbm_to_smem %s15, 16, [#allocation5], [#allocation3]
  %19 = dma.done [#allocation3], 32
  %20 = sfence
  loop: start=0, step=1, limit=2
  $region2: #{tpu_custom_call.1} parent=0 // loop_pre_header
    _
  $region3: #{tpu_custom_call.1} parent=0 // loop_header
    %s22 = sphi 0, %s26
    %p23 = scmp.ge.s32.totalorder %s22, 2
  $region4: #{tpu_custom_call.1} parent=0 // loop_header_branch
    %25 = sbr.rel (%p23) target = $region8
  $region5: #{tpu_custom_call.1} parent=0 // loop_body
    %s27 = sadd.s32 %s22, 1
    %s28 = smul.u32 %s22, 5
    %p29 = scmp.lt.s32.totalorder %s28, 10
    %s30 = scalar_select %p29, %s28, 10
    %s31 = sadd.s32 %s28, 5
    %p32 = scmp.lt.s32.totalorder %s31, 10
    %s33 = scalar_select %p32, %s31, 10
    %s34 = sadd.s32 %s30, 8
    %p35 = scmp.lt.s32.totalorder %s34, %s33
    %s36 = scalar_select %p35, %s34, %s33
    %s37 = ssub.s32 %s36, %s30
    // While loop
    $region9: #{tpu_custom_call.1} parent=5 // loop_pre_header
      _
    $region10: #{tpu_custom_call.1} parent=5 // loop_header
      %s39 = sphi 0, %s41
      %p40 = scmp.ge.s32.totalorder %s39, %s37
    $region11: #{tpu_custom_call.1} parent=5 // loop_header_branch
      %43 = sbr.rel (%p40) target = $region15
    $region12: #{tpu_custom_call.1} parent=5 // loop_body
      %s44 = sadd.s32 %s30, %s39
      %s45 = sld [smem:[#allocation4 + %s44]]
      %s46 = sld [smem:[#allocation5 + %s44]]
      %p47 = scmp.lt.s32.totalorder %s44, 0
      %s48 = ssub.s32 0, %s44
      %s49 = scalar_select %p47, %s48, %s44
      %s50 = sand.u32 %s49, 7
      %s51 = ssub.s32 0, %s50
      %s52 = scalar_select %p47, %s51, %s50
      %p53 = scmp.ne.s32.totalorder %s52, 0
      %p54 = scmp.lt.s32.totalorder %s52, 0
      %p55 = pnand %p54, %p53
      %p56 = pneg %p55
      %s57 = sadd.s32 %s52, 8
      %s58 = scalar_select %p56, %s57, %s52
      %s59 = scalar_lea.hbm %s2, %s45
      %s60 = scalar_lea.hbm %s3, %s46
      %s61 = scalar_lea.sflag [#allocation2], %s58
      %s63 = sshll.u32 1, 14
      %s64 = sxor.u32 4294967295, %s63
      %s66 = sshll.u32 %s59, 4
      %s67 = int_to_ptr.hbm [resolvable:$true] %s66
      %s68 = sshll.u32 %s60, 4
      %s69 = int_to_ptr.hbm [resolvable:$true] %s68
      %72 = dma.general %s67, 128, %s69, %s61, [#allocation6], [#allocation7], 0, 0
    $region13: #{tpu_custom_call.1} parent=5 // loop_footer
      %s41 = sadd.s32 %s39, 1
    $region14: #{tpu_custom_call.1} parent=5 // loop_footer_branch
      %38 = sbr.rel target = $region10
    $region15: #{tpu_custom_call.1} parent=5 // loop_exit
      _
    %s73 = ssub.s32 %s33, %s30
    // While loop
    $region16: #{tpu_custom_call.1} parent=5 // loop_pre_header
      _
    $region17: #{tpu_custom_call.1} parent=5 // loop_header
      %s75 = sphi 0, %s77
      %p76 = scmp.ge.s32.totalorder %s75, %s73
    $region18: #{tpu_custom_call.1} parent=5 // loop_header_branch
      %79 = sbr.rel (%p76) target = $region22
    $region19: #{tpu_custom_call.1} parent=5 // loop_body
      %s80 = sadd.s32 %s30, %s75
      %p81 = scmp.lt.s32.totalorder %s80, 0
      %s82 = ssub.s32 0, %s80
      %s83 = scalar_select %p81, %s82, %s80
      %s84 = sand.u32 %s83, 7
      %s85 = ssub.s32 0, %s84
      %s86 = scalar_select %p81, %s85, %s84
      %p87 = scmp.ne.s32.totalorder %s86, 0
      %p88 = scmp.lt.s32.totalorder %s86, 0
      %p89 = pnand %p88, %p87
      %p90 = pneg %p89
      %s91 = sadd.s32 %s86, 8
      %s92 = scalar_select %p90, %s91, %s86
      %s93 = scalar_lea.sflag [#allocation2], %s92
      %s94 = smul.u32 8, 1
      %s95 = sshll.u32 %s94, 4
      %96 = dma.done %s93, %s95
      %s97 = sadd.s32 %s80, 8
      %p98 = scmp.lt.s32.totalorder %s97, %s33
      // Predicated region
      $region23: #{tpu_custom_call.1} parent=19 // pred_check
        %p99 = pneg %p98
      $region24: #{tpu_custom_call.1} parent=19 // pred_check_branch
        %101 = sbr.rel (%p99) target = $region26
      $region25: #{tpu_custom_call.1} parent=19 // pred_region
        %s102 = sld [smem:[#allocation4 + %s97]]
        %s103 = sld [smem:[#allocation5 + %s97]]
        %p104 = scmp.lt.s32.totalorder %s97, 0
        %s105 = ssub.s32 0, %s97
        %s106 = scalar_select %p104, %s105, %s97
        %s107 = sand.u32 %s106, 7
        %s108 = ssub.s32 0, %s107
        %s109 = scalar_select %p104, %s108, %s107
        %p110 = scmp.ne.s32.totalorder %s109, 0
        %p111 = scmp.lt.s32.totalorder %s109, 0
        %p112 = pnand %p111, %p110
        %p113 = pneg %p112
        %s114 = sadd.s32 %s109, 8
        %s115 = scalar_select %p113, %s114, %s109
        %s116 = scalar_lea.hbm %s2, %s102
        %s117 = scalar_lea.hbm %s3, %s103
        %s118 = scalar_lea.sflag [#allocation2], %s115
        %s120 = sshll.u32 1, 14
        %s121 = sxor.u32 4294967295, %s120
        %s123 = sshll.u32 %s116, 4
        %s124 = int_to_ptr.hbm [resolvable:$true] %s123
        %s125 = sshll.u32 %s117, 4
        %s126 = int_to_ptr.hbm [resolvable:$true] %s125
        %129 = dma.general %s124, 128, %s126, %s118, [#allocation8], [#allocation9], 0, 0
      $region26: #{tpu_custom_call.1} parent=19 // pred_fallthru
        _
    $region20: #{tpu_custom_call.1} parent=5 // loop_footer
      %s77 = sadd.s32 %s75, 1
    $region21: #{tpu_custom_call.1} parent=5 // loop_footer_branch
      %74 = sbr.rel target = $region17
    $region22: #{tpu_custom_call.1} parent=5 // loop_exit
      _
  $region6: #{tpu_custom_call.1} parent=0 // loop_footer
    %s26 = sadd.s32 1, %s22
  $region7: #{tpu_custom_call.1} parent=0 // loop_footer_branch
    %21 = sbr.rel target = $region3
  $region8: #{tpu_custom_call.1} parent=0 // loop_exit
    _
  %130 = vsyncmov [#allocation2]
  %s131 = vpop.sfrf %130
  %p132 = scmp.eq.s32.totalorder %s131, 0
  %p133 = pneg %p132
  %135 = shalt.err (%p133)
  %s136 = scalar_lea.sflag [#allocation2], 1
  %137 = vsyncmov %s136
  %s138 = vpop.sfrf %137
  %p139 = scmp.eq.s32.totalorder %s138, 0
  %p140 = pneg %p139
  %142 = shalt.err (%p140)
  %s143 = scalar_lea.sflag [#allocation2], 2
  %144 = vsyncmov %s143
  %s145 = vpop.sfrf %144
  %p146 = scmp.eq.s32.totalorder %s145, 0
  %p147 = pneg %p146
  %149 = shalt.err (%p147)
  %s150 = scalar_lea.sflag [#allocation2], 3
  %151 = vsyncmov %s150
  %s152 = vpop.sfrf %151
  %p153 = scmp.eq.s32.totalorder %s152, 0
  %p154 = pneg %p153
  %156 = shalt.err (%p154)
  %s157 = scalar_lea.sflag [#allocation2], 4
  %158 = vsyncmov %s157
  %s159 = vpop.sfrf %158
  %p160 = scmp.eq.s32.totalorder %s159, 0
  %p161 = pneg %p160
  %163 = shalt.err (%p161)
  %s164 = scalar_lea.sflag [#allocation2], 5
  %165 = vsyncmov %s164
  %s166 = vpop.sfrf %165
  %p167 = scmp.eq.s32.totalorder %s166, 0
  %p168 = pneg %p167
  %170 = shalt.err (%p168)
  %s171 = scalar_lea.sflag [#allocation2], 6
  %172 = vsyncmov %s171
  %s173 = vpop.sfrf %172
  %p174 = scmp.eq.s32.totalorder %s173, 0
  %p175 = pneg %p174
  %177 = shalt.err (%p175)
  %s178 = scalar_lea.sflag [#allocation2], 7
  %179 = vsyncmov %s178
  %s180 = vpop.sfrf %179
  %p181 = scmp.eq.s32.totalorder %s180, 0
  %p182 = pneg %p181
  %184 = shalt.err (%p182)

</llo_original>
